<compile_context>
chip_gen: v7x
topology: tpu7x:2x2x1
jax: 0.10.0
libtpu: 0.0.40
codegen_flags: <defaults>
</compile_context>

<pallas_src>
import functools

import jax
import jax.numpy as jnp
from jax.experimental import pallas as pl
from jax.experimental.pallas import tpu as pltpu


def _round_up(a, b):
    return ((a + b - 1) // b) * b


def _tpu_vmem_capacity_bytes():
    """Physical VMEM per TensorCore; conservative fallback if unknown."""
    try:
        info = pltpu.get_tpu_info()
        for attr in ("vmem_capacity_bytes", "vmem_bytes"):
            v = getattr(info, attr, None)
            if v:
                return int(v)
    except Exception:
        pass
    return 64 << 20  # assume v7x-sized (smallest) VMEM when in doubt


def _choose_tile_m(rows, dim, hidden, num_scores, x_bytes, w_bytes):
    """Pick (tile_m, vmem_limit_bytes) per TPU generation.

    Budget covers: double-buffered x tile, double-buffered output tile,
    single-buffered resident weights (pl.Buffered(1)), and the f32
    intermediates of one tile.
    """
    vmem_cap = _tpu_vmem_capacity_bytes()
    if vmem_cap >= (96 << 20):          # v5e / v6e: 128 MiB physical VMEM
        budget, vmem_limit, max_tile, num_tc = (56 << 20), (100 << 20), 4096, 1
    else:                               # v7x: 64 MiB per TensorCore, 2 TCs
        budget, vmem_limit, max_tile, num_tc = (40 << 20), (48 << 20), 2048, 2

    # Resident, single-buffered weights -> counted ONCE.
    weights = ((dim * hidden + hidden * num_scores) * w_bytes
               + (3 * hidden + num_scores) * 4)

    def fits(t):
        x_dbuf = 2 * t * dim * x_bytes        # double-buffered x tile
        o_dbuf = 2 * num_scores * t * 4       # double-buffered (S, t) output
        interm = 2 * t * hidden * 4           # h + temporaries (f32)
        return x_dbuf + o_dbuf + weights + interm <= budget

    tile = max_tile
    while tile > 128 and not fits(tile):
        tile //= 2
    tile = max(128, min(tile, _round_up(rows, 128)))

    # Prefer >=2 grid steps, and an even step count on v7x (2 TCs share the
    # "parallel" row axis), when the problem is big enough to allow it.
    while tile > 128:
        steps = pl.cdiv(rows, tile)
        if steps >= 2 and steps % num_tc == 0:
            break
        tile = max(128, _round_up(tile // 2, 128))

    return tile, vmem_limit


def _resident_spec(shape):
    """BlockSpec for a block whose index never changes across the grid.

    Single-buffered (pl.Buffered(1)) so resident weights/biases are not
    allocated twice in VMEM; falls back to the default spec on JAX versions
    without `pipeline_mode`.
    """
    index_map = lambda i: (0,) * len(shape)
    buffered = getattr(pl, "Buffered", None)
    if buffered is not None:
        try:
            return pl.BlockSpec(shape, index_map, pipeline_mode=buffered(1))
        except TypeError:
            pass
    return pl.BlockSpec(shape, index_map)


def _scorenet_kernel(x_ref, w1_ref, b1_ref, g_ref, beta_ref, w2t_ref, b2_ref,
                     o_ref, *, eps, matmul_dtype):
    # x_ref:    (TM, dim)       tile of flattened tokens (f32 or bf16)
    # w1_ref:   (dim, hidden)   first linear, pre-transposed for x @ W (bf16)
    # b1/g/beta:(1, hidden)     f32
    # w2t_ref:  (S, hidden)     second linear, torch (out, in) layout (bf16)
    # b2_ref:   (S, 1)          f32
    # o_ref:    (S, TM)         lane-dense output (rows on lanes)
    x = x_ref[...]
    if matmul_dtype is not None and x.dtype != matmul_dtype:
        x = x.astype(matmul_dtype)          # activations cast in-kernel only

    # Linear 1 — f32 accumulation on the MXU.  Weights arrive pre-cast.
    h = jnp.dot(x, w1_ref[...], preferred_element_type=jnp.float32) + b1_ref[...]

    # LayerNorm over hidden (f32).  Two independent reductions (sum, sum of
    # squares), var = E[h²] − mean² — no serial mean -> subtract -> reduce.
    n_inv = 1.0 / h.shape[-1]
    s1 = jnp.sum(h, axis=-1, keepdims=True)
    s2 = jnp.sum(h * h, axis=-1, keepdims=True)
    mean = s1 * n_inv
    var = jnp.maximum(s2 * n_inv - mean * mean, 0.0)
    inv = jax.lax.rsqrt(var + eps)
    h = (h - mean) * (inv * g_ref[...]) + beta_ref[...]

    # ReLU (f32).
    h = jnp.maximum(h, 0.0)

    # Linear 2, transposed orientation: (S, H) · (TM, H)^T -> (S, TM) so the
    # output's last (lane) dim is the row tile -> unmasked, lane-dense stores.
    # A·Bᵀ maps to the MXU transposed-rhs path (flash-attn q·kᵀ pattern).
    if matmul_dtype is not None:
        h = h.astype(matmul_dtype)
    y = jax.lax.dot_general(
        w2t_ref[...], h,
        dimension_numbers=(((1,), (1,)), ((), ())),
        preferred_element_type=jnp.float32) + b2_ref[...]

    o_ref[...] = jax.nn.sigmoid(y).astype(o_ref.dtype)


def scorenet_forward(x, params, *, tile_m=None, eps=1e-5,
                     matmul_dtype=jnp.bfloat16):
    """x: (B, N, dim) float32/bfloat16 -> (num_scores, B, N) float32.

    matmul_dtype: dtype of MXU operands (accumulation is always f32).
    Pass matmul_dtype=None for an exact f32 matmul path.
    """
    B, N, dim = x.shape
    w1, b1, gamma, beta, w2t, b2 = params
    hidden = w1.shape[1]
    num_scores = w2t.shape[0]
    rows = B * N

    # Hoist weight casts out of the kernel: one-time, wrapper-side.  Also
    # halves weight HBM traffic and VMEM residency.
    if matmul_dtype is not None:
        w1 = w1.astype(matmul_dtype)
        w2t = w2t.astype(matmul_dtype)

    x_bytes = jnp.dtype(x.dtype).itemsize
    w_bytes = jnp.dtype(w1.dtype).itemsize
    auto_tile, vmem_limit = _choose_tile_m(
        rows, dim, hidden, num_scores, x_bytes=x_bytes, w_bytes=w_bytes)
    if tile_m is None:
        tile_m = auto_tile

    # No wrapper-side pad: Pallas handles the ragged last block; only valid
    # output lanes are ever written back to HBM.
    x2d = x.reshape(rows, dim)
    grid = (pl.cdiv(rows, tile_m),)

    weight_hbm_bytes = ((dim * hidden + hidden * num_scores) * w_bytes
                        + (3 * hidden + num_scores) * 4)
    cost = pl.CostEstimate(
        flops=2 * rows * (dim * hidden + hidden * num_scores),
        transcendentals=rows * (num_scores + 1),        # sigmoid + rsqrt
        bytes_accessed=(rows * dim * x_bytes
                        + weight_hbm_bytes
                        + rows * num_scores * 4),
    )

    out_t = pl.pallas_call(
        functools.partial(_scorenet_kernel, eps=eps, matmul_dtype=matmul_dtype),
        out_shape=jax.ShapeDtypeStruct((num_scores, rows), jnp.float32),
        grid_spec=pltpu.PrefetchScalarGridSpec(
            num_scalar_prefetch=0,
            grid=grid,
            in_specs=[
                # x tile: default double-buffering (bump to Buffered(3) only
                # if a profile shows exposed DMA at the chosen tile size).
                pl.BlockSpec((tile_m, dim), lambda i: (i, 0)),
                _resident_spec((dim, hidden)),          # w1   (bf16)
                _resident_spec((1, hidden)),            # b1   (f32)
                _resident_spec((1, hidden)),            # gamma
                _resident_spec((1, hidden)),            # beta
                _resident_spec((num_scores, hidden)),   # w2^T (bf16)
                _resident_spec((num_scores, 1)),        # b2   (f32)
            ],
            out_specs=pl.BlockSpec((num_scores, tile_m), lambda i: (0, i)),
        ),
        compiler_params=pltpu.CompilerParams(
            dimension_semantics=("parallel",),
            vmem_limit_bytes=vmem_limit,
        ),
        cost_estimate=cost,
    )(x2d, w1, b1, gamma, beta, w2t, b2)

    # (S, rows) reshapes directly to the PyTorch layout (S, B, N)
    # (== score_net(x).permute(2, 0, 1)).
    return out_t.reshape(num_scores, B, N)


def init_params(key, dim, num_scores):
    """Deterministic init matching the shapes of the PyTorch module."""
    hidden = dim // 2
    k1, k2, k3, k4 = jax.random.split(key, 4)
    # w1 stored pre-transposed for x @ W; w2 kept in torch (out, in) layout
    # because the kernel computes the second matmul in transposed orientation.
    w1 = jax.random.normal(k1, (dim, hidden), jnp.float32) * 0.05
    b1 = jax.random.normal(k2, (1, hidden), jnp.float32) * 0.05
    gamma = jnp.ones((1, hidden), jnp.float32)   # LayerNorm default weight
    beta = jnp.zeros((1, hidden), jnp.float32)   # LayerNorm default bias
    w2t = jax.random.normal(k3, (num_scores, hidden), jnp.float32) * 0.05
    b2 = jax.random.normal(k4, (num_scores, 1), jnp.float32) * 0.05
    return (w1, b1, gamma, beta, w2t, b2)


def _ref_forward(x, params, eps=1e-5):
    """Pure-JAX reference mirroring the torch module (f32 throughout)."""
    w1, b1, gamma, beta, w2t, b2 = params
    h = x @ w1 + b1
    mean = h.mean(-1, keepdims=True)
    var = ((h - mean) ** 2).mean(-1, keepdims=True)
    h = (h - mean) * jax.lax.rsqrt(var + eps) * gamma + beta
    h = jnp.maximum(h, 0.0)
    y = jax.nn.sigmoid(h @ w2t.T + b2[:, 0])
    return jnp.transpose(y, (2, 0, 1))


if __name__ == "__main__":
    B, N, dim, num_scores = 2, 8, 32, 2
    key = jax.random.PRNGKey(0)
    kx, kp = jax.random.split(key)
    x = jax.random.normal(kx, (B, N, dim), jnp.float32)
    params = init_params(kp, dim, num_scores)

    ref = _ref_forward(x, params)

    # Exact path (f32 MXU operands): matches the reference tightly.
    out_f32 = jax.block_until_ready(scorenet_forward(x, params, matmul_dtype=None))
    assert out_f32.shape == (num_scores, B, N), out_f32.shape
    assert jnp.allclose(out_f32, ref, atol=1e-5, rtol=1e-5), "f32 path mismatch"

    # Default fast path (bf16 MXU operands, f32 accumulation): relaxed tol.
    out = jax.block_until_ready(scorenet_forward(x, params))
    assert out.shape == (num_scores, B, N), out.shape
    assert jnp.allclose(out, ref, atol=2e-2, rtol=2e-2), "bf16 path mismatch"

    print("KERNEL_OK")
</pallas_src>

<mosaic_0001>
module attributes {stable_mosaic.version = 11 : i64} {
  func.func @_scorenet_kernel(%arg0: i32, %arg1: memref<128x32xf32, #tpu.memory_space<vmem>>, %arg2: memref<32x16xf32, #tpu.memory_space<vmem>>, %arg3: memref<1x16xf32, #tpu.memory_space<vmem>>, %arg4: memref<1x16xf32, #tpu.memory_space<vmem>>, %arg5: memref<1x16xf32, #tpu.memory_space<vmem>>, %arg6: memref<2x16xf32, #tpu.memory_space<vmem>>, %arg7: memref<2x1xf32, #tpu.memory_space<vmem>>, %arg8: memref<2x128xf32, #tpu.memory_space<vmem>>) attributes {dimension_semantics = [#tpu.dimension_semantics<parallel>], iteration_bounds = array<i64: 1>, scalar_prefetch = 0 : i64, scratch_operands = 0 : i64, tpu.core_type = #tpu.core_type<tc>, window_params = [{transform_indices = @transform_0, window_bounds = array<i64: 128, 32>}, {pipeline_mode = #tpu.pipeline_mode<synchronous>, transform_indices = @transform_1, window_bounds = array<i64: 32, 16>}, {pipeline_mode = #tpu.pipeline_mode<synchronous>, transform_indices = @transform_2, window_bounds = array<i64: 1, 16>}, {pipeline_mode = #tpu.pipeline_mode<synchronous>, transform_indices = @transform_3, window_bounds = array<i64: 1, 16>}, {pipeline_mode = #tpu.pipeline_mode<synchronous>, transform_indices = @transform_4, window_bounds = array<i64: 1, 16>}, {pipeline_mode = #tpu.pipeline_mode<synchronous>, transform_indices = @transform_5, window_bounds = array<i64: 2, 16>}, {pipeline_mode = #tpu.pipeline_mode<synchronous>, transform_indices = @transform_6, window_bounds = array<i64: 2, 1>}, {transform_indices = @transform_7, window_bounds = array<i64: 2, 128>}]} {
    %c0 = arith.constant 0 : index
    %c0_0 = arith.constant 0 : index
    %0 = vector.load %arg1[%c0, %c0_0] : memref<128x32xf32, #tpu.memory_space<vmem>>, vector<128x32xf32>
    %c0_1 = arith.constant 0 : index
    %c0_2 = arith.constant 0 : index
    %1 = vector.load %arg2[%c0_1, %c0_2] : memref<32x16xf32, #tpu.memory_space<vmem>>, vector<32x16xf32>
    %cst = arith.constant dense<0.000000e+00> : vector<128x16xf32>
    %2 = tpu.matmul %0, %1, %cst {dimension_numbers = #tpu.dot_dimension_numbers<[1], [0], [0], [1], [0, 0, 1, 1], [], []>} : vector<128x32xf32>, vector<32x16xf32>, vector<128x16xf32> -> vector<128x16xf32>
    %c0_3 = arith.constant 0 : index
    %c0_4 = arith.constant 0 : index
    %3 = vector.load %arg3[%c0_3, %c0_4] : memref<1x16xf32, #tpu.memory_space<vmem>>, vector<1x16xf32>
    %4 = vector.broadcast %3 : vector<1x16xf32> to vector<128x16xf32>
    %5 = arith.addf %2, %4 : vector<128x16xf32>
    %cst_5 = arith.constant dense<0.000000e+00> : vector<128xf32>
    %6 = vector.multi_reduction <add>, %5, %cst_5 [1] : vector<128x16xf32> to vector<128xf32>
    %7 = vector.shape_cast %6 : vector<128xf32> to vector<128x1xf32>
    %8 = arith.mulf %5, %5 : vector<128x16xf32>
    %cst_6 = arith.constant dense<0.000000e+00> : vector<128xf32>
    %9 = vector.multi_reduction <add>, %8, %cst_6 [1] : vector<128x16xf32> to vector<128xf32>
    %10 = vector.shape_cast %9 : vector<128xf32> to vector<128x1xf32>
    %cst_7 = arith.constant 6.250000e-02 : f32
    %11 = vector.broadcast %cst_7 : f32 to vector<128x1xf32>
    %12 = arith.mulf %7, %11 : vector<128x1xf32>
    %cst_8 = arith.constant 6.250000e-02 : f32
    %13 = vector.broadcast %cst_8 : f32 to vector<128x1xf32>
    %14 = arith.mulf %10, %13 : vector<128x1xf32>
    %15 = arith.mulf %12, %12 : vector<128x1xf32>
    %16 = arith.subf %14, %15 : vector<128x1xf32>
    %cst_9 = arith.constant 0.000000e+00 : f32
    %17 = vector.broadcast %cst_9 : f32 to vector<128x1xf32>
    %18 = arith.maximumf %16, %17 : vector<128x1xf32>
    %cst_10 = arith.constant 9.99999974E-6 : f32
    %19 = vector.broadcast %cst_10 : f32 to vector<128x1xf32>
    %20 = arith.addf %18, %19 : vector<128x1xf32>
    %21 = math.rsqrt %20 : vector<128x1xf32>
    %22 = vector.broadcast %12 : vector<128x1xf32> to vector<128x16xf32>
    %23 = arith.subf %5, %22 : vector<128x16xf32>
    %c0_11 = arith.constant 0 : index
    %c0_12 = arith.constant 0 : index
    %24 = vector.load %arg4[%c0_11, %c0_12] : memref<1x16xf32, #tpu.memory_space<vmem>>, vector<1x16xf32>
    %25 = vector.broadcast %21 : vector<128x1xf32> to vector<128x16xf32>
    %26 = vector.broadcast %24 : vector<1x16xf32> to vector<128x16xf32>
    %27 = arith.mulf %25, %26 : vector<128x16xf32>
    %28 = arith.mulf %23, %27 : vector<128x16xf32>
    %c0_13 = arith.constant 0 : index
    %c0_14 = arith.constant 0 : index
    %29 = vector.load %arg5[%c0_13, %c0_14] : memref<1x16xf32, #tpu.memory_space<vmem>>, vector<1x16xf32>
    %30 = vector.broadcast %29 : vector<1x16xf32> to vector<128x16xf32>
    %31 = arith.addf %28, %30 : vector<128x16xf32>
    %cst_15 = arith.constant 0.000000e+00 : f32
    %32 = vector.broadcast %cst_15 : f32 to vector<128x16xf32>
    %33 = arith.maximumf %31, %32 : vector<128x16xf32>
    %c0_16 = arith.constant 0 : index
    %c0_17 = arith.constant 0 : index
    %34 = vector.load %arg6[%c0_16, %c0_17] : memref<2x16xf32, #tpu.memory_space<vmem>>, vector<2x16xf32>
    %cst_18 = arith.constant dense<0.000000e+00> : vector<2x128xf32>
    %35 = tpu.matmul %34, %33, %cst_18 {dimension_numbers = #tpu.dot_dimension_numbers<[1], [1], [0], [0], [0, 0, 1, 0], [], []>} : vector<2x16xf32>, vector<128x16xf32>, vector<2x128xf32> -> vector<2x128xf32>
    %c0_19 = arith.constant 0 : index
    %c0_20 = arith.constant 0 : index
    %36 = vector.load %arg7[%c0_19, %c0_20] : memref<2x1xf32, #tpu.memory_space<vmem>>, vector<2x1xf32>
    %37 = vector.broadcast %36 : vector<2x1xf32> to vector<2x128xf32>
    %38 = arith.addf %35, %37 : vector<2x128xf32>
    %39 = arith.negf %38 : vector<2x128xf32>
    %40 = math.exp %39 : vector<2x128xf32>
    %cst_21 = arith.constant 1.000000e+00 : f32
    %41 = vector.broadcast %cst_21 : f32 to vector<2x128xf32>
    %42 = arith.addf %41, %40 : vector<2x128xf32>
    %43 = arith.divf %41, %42 : vector<2x128xf32>
    %c0_22 = arith.constant 0 : index
    %c0_23 = arith.constant 0 : index
    %44 = vector.load %arg8[%c0_22, %c0_23] : memref<2x128xf32, #tpu.memory_space<vmem>>, vector<2x128xf32>
    tpu.vector_store %arg8[%c0_22, %c0_23], %43 {strides = array<i32>} : memref<2x128xf32, #tpu.memory_space<vmem>>, vector<2x128xf32>,
    return
  }
  func.func @transform_0(%arg0: i32) -> (i32, i32) {
    %c0_i32 = arith.constant 0 : i32
    %c0_i32_0 = arith.constant 0 : i32
    return %arg0, %c0_i32 : i32, i32
  }
  func.func @transform_1(%arg0: i32) -> (i32, i32) {
    %c0_i32 = arith.constant 0 : i32
    %c0_i32_0 = arith.constant 0 : i32
    %c0_i32_1 = arith.constant 0 : i32
    return %c0_i32, %c0_i32_0 : i32, i32
  }
  func.func @transform_2(%arg0: i32) -> (i32, i32) {
    %c0_i32 = arith.constant 0 : i32
    %c0_i32_0 = arith.constant 0 : i32
    %c0_i32_1 = arith.constant 0 : i32
    return %c0_i32, %c0_i32_0 : i32, i32
  }
  func.func @transform_3(%arg0: i32) -> (i32, i32) {
    %c0_i32 = arith.constant 0 : i32
    %c0_i32_0 = arith.constant 0 : i32
    %c0_i32_1 = arith.constant 0 : i32
    return %c0_i32, %c0_i32_0 : i32, i32
  }
  func.func @transform_4(%arg0: i32) -> (i32, i32) {
    %c0_i32 = arith.constant 0 : i32
    %c0_i32_0 = arith.constant 0 : i32
    %c0_i32_1 = arith.constant 0 : i32
    return %c0_i32, %c0_i32_0 : i32, i32
  }
  func.func @transform_5(%arg0: i32) -> (i32, i32) {
    %c0_i32 = arith.constant 0 : i32
    %c0_i32_0 = arith.constant 0 : i32
    %c0_i32_1 = arith.constant 0 : i32
    return %c0_i32, %c0_i32_0 : i32, i32
  }
  func.func @transform_6(%arg0: i32) -> (i32, i32) {
    %c0_i32 = arith.constant 0 : i32
    %c0_i32_0 = arith.constant 0 : i32
    %c0_i32_1 = arith.constant 0 : i32
    return %c0_i32, %c0_i32_0 : i32, i32
  }
  func.func @transform_7(%arg0: i32) -> (i32, i32) {
    %c0_i32 = arith.constant 0 : i32
    %c0_i32_0 = arith.constant 0 : i32
    return %c0_i32, %arg0 : i32, i32
  }
}

</mosaic_0001>

<llo_original>
// kernel: tpu_custom_call.1
$region0: #{tpu_custom_call.1}
  #allocation0 [shape = 'u32[]', space=smem, size = 0x4, offset = 0x4, fixed_abs, tag = 'smem constant byte address 0x4 - core index']
  #allocation1 [shape = 'u32[144,128]{1,0:T(1,128)}', space=vmem, size = 0x12000, scoped, tag = 'internal scratch']
  %s0 = inlined_call_operand.vmem [shape: f32[16,32], index: 0, kind: input, shape index: {}]
  %s1 = inlined_call_operand.vmem [shape: f32[32,16], index: 1, kind: input, shape index: {}]
  %s2 = inlined_call_operand.vmem [shape: f32[1,16], index: 2, kind: input, shape index: {}]
  %s3 = inlined_call_operand.vmem [shape: f32[1,16], index: 3, kind: input, shape index: {}]
  %s4 = inlined_call_operand.vmem [shape: f32[1,16], index: 4, kind: input, shape index: {}]
  %s5 = inlined_call_operand.vmem [shape: f32[2,16], index: 5, kind: input, shape index: {}]
  %s6 = inlined_call_operand.vmem [shape: f32[2,1], index: 6, kind: input, shape index: {}]
  %s7 = inlined_call_operand.hbm [shape: f32[2,16], index: 7, kind: output, shape index: {}]
  %s8 = sld [smem:[#allocation0]]
  $region38: #{tpu_custom_call.1} parent=0
    _
  %s10 = ssub.s32 1, %s8
  %s11 = scalar_select 0, %s10, %s8
  $region1: #{tpu_custom_call.1} parent=0
    #allocation2 [shape = 'u8[1024]{0}', space=vmem, size = 0x400, scoped, tag = 'output window, operand 0, single buffered']
    #allocation3 [shape = 's32[1]{0}', space=sflag, size = 0x4, scoped, tag = 'scoped memory for tpu_custom_call.1']
    %12 = vsyncpa [#allocation3], 0
    // Predicated region
    $region2: #{tpu_custom_call.1} parent=1 // pred_check
      _
    $region3: #{tpu_custom_call.1} parent=1 // pred_check_branch
      %14 = sbr.rel (0) target = $region5
    $region4: #{tpu_custom_call.1} parent=1 // pred_region
      _
    $region5: #{tpu_custom_call.1} parent=1 // pred_fallthru
      _
    // Predicated region
    $region6: #{tpu_custom_call.1} parent=1 // pred_check
      _
    $region7: #{tpu_custom_call.1} parent=1 // pred_check_branch
      %16 = sbr.rel (0) target = $region9
    $region8: #{tpu_custom_call.1} parent=1 // pred_region
      _
    $region9: #{tpu_custom_call.1} parent=1 // pred_fallthru
      _
    // Predicated region
    $region10: #{tpu_custom_call.1} parent=1 // pred_check
      _
    $region11: #{tpu_custom_call.1} parent=1 // pred_check_branch
      %18 = sbr.rel (0) target = $region13
    $region12: #{tpu_custom_call.1} parent=1 // pred_region
      _
    $region13: #{tpu_custom_call.1} parent=1 // pred_fallthru
      _
    // Predicated region
    $region14: #{tpu_custom_call.1} parent=1 // pred_check
      _
    $region15: #{tpu_custom_call.1} parent=1 // pred_check_branch
      %20 = sbr.rel (0) target = $region17
    $region16: #{tpu_custom_call.1} parent=1 // pred_region
      _
    $region17: #{tpu_custom_call.1} parent=1 // pred_fallthru
      _
    // Predicated region
    $region18: #{tpu_custom_call.1} parent=1 // pred_check
      _
    $region19: #{tpu_custom_call.1} parent=1 // pred_check_branch
      %22 = sbr.rel (0) target = $region21
    $region20: #{tpu_custom_call.1} parent=1 // pred_region
      _
    $region21: #{tpu_custom_call.1} parent=1 // pred_fallthru
      _
    // Predicated region
    $region22: #{tpu_custom_call.1} parent=1 // pred_check
      _
    $region23: #{tpu_custom_call.1} parent=1 // pred_check_branch
      %24 = sbr.rel (0) target = $region25
    $region24: #{tpu_custom_call.1} parent=1 // pred_region
      _
    $region25: #{tpu_custom_call.1} parent=1 // pred_fallthru
      _
    // Predicated region
    $region26: #{tpu_custom_call.1} parent=1 // pred_check
      _
    $region27: #{tpu_custom_call.1} parent=1 // pred_check_branch
      %26 = sbr.rel (0) target = $region29
    $region28: #{tpu_custom_call.1} parent=1 // pred_region
      _
    $region29: #{tpu_custom_call.1} parent=1 // pred_fallthru
      _
    %v27 = vld [vmem:[%s0] sm:$0xff]
    %v28 = vld [vmem:[%s0 + $0x8] sm:$0xff]
    %v29 = vld [vmem:[%s0 + $0x10] sm:$0xff]
    %v30 = vld [vmem:[%s0 + $0x18] sm:$0xff]
    %v31 = vld [vmem:[%s0 + $0x20] sm:$0xff]
    %v32 = vld [vmem:[%s0 + $0x28] sm:$0xff]
    %v33 = vld [vmem:[%s0 + $0x30] sm:$0xff]
    %v34 = vld [vmem:[%s0 + $0x38] sm:$0xff]
    %v35 = vld [vmem:[%s0 + $0x40] sm:$0xff]
    %v36 = vld [vmem:[%s0 + $0x48] sm:$0xff]
    %v37 = vld [vmem:[%s0 + $0x50] sm:$0xff]
    %v38 = vld [vmem:[%s0 + $0x58] sm:$0xff]
    %v39 = vld [vmem:[%s0 + $0x60] sm:$0xff]
    %v40 = vld [vmem:[%s0 + $0x68] sm:$0xff]
    %v41 = vld [vmem:[%s0 + $0x70] sm:$0xff]
    %v42 = vld [vmem:[%s0 + $0x78] sm:$0xff]
    %v43 = vld [vmem:[%s1] sm:$0xff]
    %v44 = vld [vmem:[%s1 + $0x8] sm:$0xff]
    %v45 = vld [vmem:[%s1 + $0x10] sm:$0xff]
    %v46 = vld [vmem:[%s1 + $0x18] sm:$0xff]
    %v47 = vld [vmem:[%s2] sm:$0x1]
    %v49 = vlaneseq
    %v50 = vshrl.u32 %v49, 7
    %v51 = vsub.s32 0, %v50
    %v52 = vrot.slane %v47, %v51
    %vm54 = vcmask 261120
    %v56 = vsel %vm54, %v27, 0
    %v59 = vsel %vm54, %v28, 0
    %v62 = vsel %vm54, %v29, 0
    %v65 = vsel %vm54, %v30, 0
    %v68 = vsel %vm54, %v31, 0
    %v71 = vsel %vm54, %v32, 0
    %v74 = vsel %vm54, %v33, 0
    %v77 = vsel %vm54, %v34, 0
    %v80 = vsel %vm54, %v35, 0
    %v83 = vsel %vm54, %v36, 0
    %v86 = vsel %vm54, %v37, 0
    %v89 = vsel %vm54, %v38, 0
    %v92 = vsel %vm54, %v39, 0
    %v95 = vsel %vm54, %v40, 0
    %v98 = vsel %vm54, %v41, 0
    %v101 = vsel %vm54, %v42, 0
    %103 = vmatprep.subr.mxu0 0.0
    %104 = vmatpush1.msra.mxu0 %v43
    %105 = vmatprep.subr.mxu0 0.0
    %106 = vmatpush1.msra.mxu0 %v44
    %107 = vmatprep.subr.mxu0 0.0
    %108 = vmatpush1.msra.mxu0 %v45
    %109 = vmatprep.subr.mxu0 0.0
    %110 = vmatpush1.msra.mxu0 %v46
    %111 = vmatprep.subr.mxu0 0.0
    %112 = vmatpush1.msra.mxu0 0.0
    %113 = vmatprep.subr.mxu0 0.0
    %114 = vmatpush1.msra.mxu0 0.0
    %115 = vmatprep.subr.mxu0 0.0
    %116 = vmatpush1.msra.mxu0 0.0
    %117 = vmatprep.subr.mxu0 0.0
    %118 = vmatpush1.msra.mxu0 0.0
    %119 = vmatprep.subr.mxu0 0.0
    %120 = vmatpush1.msra.mxu0 0.0
    %121 = vmatprep.subr.mxu0 0.0
    %122 = vmatpush1.msra.mxu0 0.0
    %123 = vmatprep.subr.mxu0 0.0
    %124 = vmatpush1.msra.mxu0 0.0
    %125 = vmatprep.subr.mxu0 0.0
    %126 = vmatpush1.msra.mxu0 0.0
    %127 = vmatprep.subr.mxu0 0.0
    %128 = vmatpush1.msra.mxu0 0.0
    %129 = vmatprep.subr.mxu0 0.0
    %130 = vmatpush1.msra.mxu0 0.0
    %131 = vmatprep.subr.mxu0 0.0
    %132 = vmatpush1.msra.mxu0 0.0
    %133 = vmatprep.subr.mxu0 0.0
    %134 = vmatpush1.msra.mxu0 0.0
    %135 = vmatprep.subr.mxu0 0.0
    %136 = vmatpush1.msra.mxu0 0.0
    %137 = vmatprep.subr.mxu0 0.0
    %138 = vmatpush1.msra.mxu0 0.0
    %139 = vmatprep.subr.mxu0 0.0
    %140 = vmatpush1.msra.mxu0 0.0
    %141 = vmatprep.subr.mxu0 0.0
    %142 = vmatpush1.msra.mxu0 0.0
    %143 = vmatprep.subr.mxu0 0.0
    %144 = vmatpush1.msra.mxu0 0.0
    %145 = vmatprep.subr.mxu0 0.0
    %146 = vmatpush1.msra.mxu0 0.0
    %147 = vmatprep.subr.mxu0 0.0
    %148 = vmatpush1.msra.mxu0 0.0
    %149 = vmatprep.subr.mxu0 0.0
    %150 = vmatpush1.msra.mxu0 0.0
    %151 = vmatprep.subr.mxu0 0.0
    %152 = vmatpush1.msra.mxu0 0.0
    %153 = vmatprep.subr.mxu0 0.0
    %154 = vmatpush1.msra.mxu0 0.0
    %155 = vmatprep.subr.mxu0 0.0
    %156 = vmatpush1.msra.mxu0 0.0
    %157 = vmatprep.subr.mxu0 0.0
    %158 = vmatpush1.msra.mxu0 0.0
    %159 = vmatprep.subr.mxu0 0.0
    %160 = vmatpush1.msra.mxu0 0.0
    %161 = vmatprep.subr.mxu0 0.0
    %162 = vmatpush1.msra.mxu0 0.0
    %163 = vmatprep.subr.mxu0 0.0
    %164 = vmatpush1.msra.mxu0 0.0
    %165 = vmatprep.subr.mxu0 0.0
    %166 = vmatpush1.msra.mxu0 0.0
    %167 = vmatprep.mubr.f32.mxu0 0.0
    %168 = vmatmul.mubr.f32.gmra.mrb[0].mxu0 %v56
    %v169 = vpop.f32.mrb[0].mxu0
    %v170 = vadd.f32 %v52, %v169
    %v171 = vpop.f32.mrb[0].mxu0
    %172 = vmatprep.mubr.f32.mxu0 0.0
    %173 = vmatmul.mubr.f32.gmra.mrb[0].mxu0 %v59
    %v174 = vpop.f32.mrb[0].mxu0
    %v175 = vadd.f32 %v52, %v174
    %v176 = vpop.f32.mrb[0].mxu0
    %177 = vmatprep.mubr.f32.mxu0 0.0
    %178 = vmatmul.mubr.f32.gmra.mrb[0].mxu0 %v62
    %v179 = vpop.f32.mrb[0].mxu0
    %v180 = vadd.f32 %v52, %v179
    %v181 = vpop.f32.mrb[0].mxu0
    %182 = vmatprep.mubr.f32.mxu0 0.0
    %183 = vmatmul.mubr.f32.gmra.mrb[0].mxu0 %v65
    %v184 = vpop.f32.mrb[0].mxu0
    %v185 = vadd.f32 %v52, %v184
    %v186 = vpop.f32.mrb[0].mxu0
    %187 = vmatprep.mubr.f32.mxu0 0.0
    %188 = vmatmul.mubr.f32.gmra.mrb[0].mxu0 %v68
    %v189 = vpop.f32.mrb[0].mxu0
    %v190 = vadd.f32 %v52, %v189
    %v191 = vpop.f32.mrb[0].mxu0
    %192 = vmatprep.mubr.f32.mxu0 0.0
    %193 = vmatmul.mubr.f32.gmra.mrb[0].mxu0 %v71
    %v194 = vpop.f32.mrb[0].mxu0
    %v195 = vadd.f32 %v52, %v194
    %v196 = vpop.f32.mrb[0].mxu0
    %197 = vmatprep.mubr.f32.mxu0 0.0
    %198 = vmatmul.mubr.f32.gmra.mrb[0].mxu0 %v74
    %v199 = vpop.f32.mrb[0].mxu0
    %v200 = vadd.f32 %v52, %v199
    %v201 = vpop.f32.mrb[0].mxu0
    %202 = vmatprep.mubr.f32.mxu0 0.0
    %203 = vmatmul.mubr.f32.gmra.mrb[0].mxu0 %v77
    %v204 = vpop.f32.mrb[0].mxu0
    %v205 = vadd.f32 %v52, %v204
    %v206 = vpop.f32.mrb[0].mxu0
    %207 = vmatprep.mubr.f32.mxu0 0.0
    %208 = vmatmul.mubr.f32.gmra.mrb[0].mxu0 %v80
    %v209 = vpop.f32.mrb[0].mxu0
    %v210 = vadd.f32 %v52, %v209
    %v211 = vpop.f32.mrb[0].mxu0
    %212 = vmatprep.mubr.f32.mxu0 0.0
    %213 = vmatmul.mubr.f32.gmra.mrb[0].mxu0 %v83
    %v214 = vpop.f32.mrb[0].mxu0
    %v215 = vadd.f32 %v52, %v214
    %v216 = vpop.f32.mrb[0].mxu0
    %217 = vmatprep.mubr.f32.mxu0 0.0
    %218 = vmatmul.mubr.f32.gmra.mrb[0].mxu0 %v86
    %v219 = vpop.f32.mrb[0].mxu0
    %v220 = vadd.f32 %v52, %v219
    %v221 = vpop.f32.mrb[0].mxu0
    %222 = vmatprep.mubr.f32.mxu0 0.0
    %223 = vmatmul.mubr.f32.gmra.mrb[0].mxu0 %v89
    %v224 = vpop.f32.mrb[0].mxu0
    %v225 = vadd.f32 %v52, %v224
    %v226 = vpop.f32.mrb[0].mxu0
    %227 = vmatprep.mubr.f32.mxu0 0.0
    %228 = vmatmul.mubr.f32.gmra.mrb[0].mxu0 %v92
    %v229 = vpop.f32.mrb[0].mxu0
    %v230 = vadd.f32 %v52, %v229
    %v231 = vpop.f32.mrb[0].mxu0
    %232 = vmatprep.mubr.f32.mxu0 0.0
    %233 = vmatmul.mubr.f32.gmra.mrb[0].mxu0 %v95
    %v234 = vpop.f32.mrb[0].mxu0
    %v235 = vadd.f32 %v52, %v234
    %v236 = vpop.f32.mrb[0].mxu0
    %237 = vmatprep.mubr.f32.mxu0 0.0
    %238 = vmatmul.mubr.f32.gmra.mrb[0].mxu0 %v98
    %v239 = vpop.f32.mrb[0].mxu0
    %v240 = vadd.f32 %v52, %v239
    %v241 = vpop.f32.mrb[0].mxu0
    %242 = vmatprep.mubr.f32.mxu0 0.0
    %243 = vmatmul.mubr.f32.gmra.mrb[0].mxu0 %v101
    %v244 = vpop.f32.mrb[0].mxu0
    %v245 = vadd.f32 %v52, %v244
    %v246 = vpop.f32.mrb[0].mxu0
    %247 = vdwg.mxu0
    %vm248 = vcmask 130048
    %v249 = vsel %vm248, %v170, 0.0
    %250 = vadd.xlane.f32.xlu0 %v249
    %v251 = vpop.xlane.xlu0 %250
    %v252 = vsel %vm248, %v175, 0.0
    %253 = vadd.xlane.f32.xlu0 %v252
    %v254 = vpop.xlane.xlu0 %253
    %v255 = vsel %vm248, %v180, 0.0
    %256 = vadd.xlane.f32.xlu0 %v255
    %v257 = vpop.xlane.xlu0 %256
    %v258 = vsel %vm248, %v185, 0.0
    %259 = vadd.xlane.f32.xlu0 %v258
    %v260 = vpop.xlane.xlu0 %259
    %v261 = vsel %vm248, %v190, 0.0
    %262 = vadd.xlane.f32.xlu0 %v261
    %v263 = vpop.xlane.xlu0 %262
    %v264 = vsel %vm248, %v195, 0.0
    %265 = vadd.xlane.f32.xlu0 %v264
    %v266 = vpop.xlane.xlu0 %265
    %v267 = vsel %vm248, %v200, 0.0
    %268 = vadd.xlane.f32.xlu0 %v267
    %v269 = vpop.xlane.xlu0 %268
    %v270 = vsel %vm248, %v205, 0.0
    %271 = vadd.xlane.f32.xlu0 %v270
    %v272 = vpop.xlane.xlu0 %271
    %v273 = vsel %vm248, %v210, 0.0
    %274 = vadd.xlane.f32.xlu0 %v273
    %v275 = vpop.xlane.xlu0 %274
    %v276 = vsel %vm248, %v215, 0.0
    %277 = vadd.xlane.f32.xlu0 %v276
    %v278 = vpop.xlane.xlu0 %277
    %v279 = vsel %vm248, %v220, 0.0
    %280 = vadd.xlane.f32.xlu0 %v279
    %v281 = vpop.xlane.xlu0 %280
    %v282 = vsel %vm248, %v225, 0.0
    %283 = vadd.xlane.f32.xlu0 %v282
    %v284 = vpop.xlane.xlu0 %283
    %v285 = vsel %vm248, %v230, 0.0
    %286 = vadd.xlane.f32.xlu0 %v285
    %v287 = vpop.xlane.xlu0 %286
    %v288 = vsel %vm248, %v235, 0.0
    %289 = vadd.xlane.f32.xlu0 %v288
    %v290 = vpop.xlane.xlu0 %289
    %v291 = vsel %vm248, %v240, 0.0
    %292 = vadd.xlane.f32.xlu0 %v291
    %v293 = vpop.xlane.xlu0 %292
    %v294 = vsel %vm248, %v245, 0.0
    %295 = vadd.xlane.f32.xlu0 %v294
    %v296 = vpop.xlane.xlu0 %295
    %v297 = vmul.f32 %v170, %v170
    %v298 = vmul.f32 %v175, %v175
    %v299 = vmul.f32 %v180, %v180
    %v300 = vmul.f32 %v185, %v185
    %v301 = vmul.f32 %v190, %v190
    %v302 = vmul.f32 %v195, %v195
    %v303 = vmul.f32 %v200, %v200
    %v304 = vmul.f32 %v205, %v205
    %v305 = vmul.f32 %v210, %v210
    %v306 = vmul.f32 %v215, %v215
    %v307 = vmul.f32 %v220, %v220
    %v308 = vmul.f32 %v225, %v225
    %v309 = vmul.f32 %v230, %v230
    %v310 = vmul.f32 %v235, %v235
    %v311 = vmul.f32 %v240, %v240
    %v312 = vmul.f32 %v245, %v245
    %v313 = vsel %vm248, %v297, 0.0
    %314 = vadd.xlane.f32.xlu0 %v313
    %v315 = vpop.xlane.xlu0 %314
    %v316 = vsel %vm248, %v298, 0.0
    %317 = vadd.xlane.f32.xlu0 %v316
    %v318 = vpop.xlane.xlu0 %317
    %v319 = vsel %vm248, %v299, 0.0
    %320 = vadd.xlane.f32.xlu0 %v319
    %v321 = vpop.xlane.xlu0 %320
    %v322 = vsel %vm248, %v300, 0.0
    %323 = vadd.xlane.f32.xlu0 %v322
    %v324 = vpop.xlane.xlu0 %323
    %v325 = vsel %vm248, %v301, 0.0
    %326 = vadd.xlane.f32.xlu0 %v325
    %v327 = vpop.xlane.xlu0 %326
    %v328 = vsel %vm248, %v302, 0.0
    %329 = vadd.xlane.f32.xlu0 %v328
    %v330 = vpop.xlane.xlu0 %329
    %v331 = vsel %vm248, %v303, 0.0
    %332 = vadd.xlane.f32.xlu0 %v331
    %v333 = vpop.xlane.xlu0 %332
    %v334 = vsel %vm248, %v304, 0.0
    %335 = vadd.xlane.f32.xlu0 %v334
    %v336 = vpop.xlane.xlu0 %335
    %v337 = vsel %vm248, %v305, 0.0
    %338 = vadd.xlane.f32.xlu0 %v337
    %v339 = vpop.xlane.xlu0 %338
    %v340 = vsel %vm248, %v306, 0.0
    %341 = vadd.xlane.f32.xlu0 %v340
    %v342 = vpop.xlane.xlu0 %341
    %v343 = vsel %vm248, %v307, 0.0
    %344 = vadd.xlane.f32.xlu0 %v343
    %v345 = vpop.xlane.xlu0 %344
    %v346 = vsel %vm248, %v308, 0.0
    %347 = vadd.xlane.f32.xlu0 %v346
    %v348 = vpop.xlane.xlu0 %347
    %v349 = vsel %vm248, %v309, 0.0
    %350 = vadd.xlane.f32.xlu0 %v349
    %v351 = vpop.xlane.xlu0 %350
    %v352 = vsel %vm248, %v310, 0.0
    %353 = vadd.xlane.f32.xlu0 %v352
    %v354 = vpop.xlane.xlu0 %353
    %v355 = vsel %vm248, %v311, 0.0
    %356 = vadd.xlane.f32.xlu0 %v355
    %v357 = vpop.xlane.xlu0 %356
    %v358 = vsel %vm248, %v312, 0.0
    %359 = vadd.xlane.f32.xlu0 %v358
    %v360 = vpop.xlane.xlu0 %359
    %v361 = vmul.f32 %v251, 0.0625
    %v362 = vmul.f32 %v254, 0.0625
    %v363 = vmul.f32 %v257, 0.0625
    %v364 = vmul.f32 %v260, 0.0625
    %v365 = vmul.f32 %v263, 0.0625
    %v366 = vmul.f32 %v266, 0.0625
    %v367 = vmul.f32 %v269, 0.0625
    %v368 = vmul.f32 %v272, 0.0625
    %v369 = vmul.f32 %v275, 0.0625
    %v370 = vmul.f32 %v278, 0.0625
    %v371 = vmul.f32 %v281, 0.0625
    %v372 = vmul.f32 %v284, 0.0625
    %v373 = vmul.f32 %v287, 0.0625
    %v374 = vmul.f32 %v290, 0.0625
    %v375 = vmul.f32 %v293, 0.0625
    %v376 = vmul.f32 %v296, 0.0625
    %v377 = vmul.f32 %v315, 0.0625
    %v378 = vmul.f32 %v318, 0.0625
    %v379 = vmul.f32 %v321, 0.0625
    %v380 = vmul.f32 %v324, 0.0625
    %v381 = vmul.f32 %v327, 0.0625
    %v382 = vmul.f32 %v330, 0.0625
    %v383 = vmul.f32 %v333, 0.0625
    %v384 = vmul.f32 %v336, 0.0625
    %v385 = vmul.f32 %v339, 0.0625
    %v386 = vmul.f32 %v342, 0.0625
    %v387 = vmul.f32 %v345, 0.0625
    %v388 = vmul.f32 %v348, 0.0625
    %v389 = vmul.f32 %v351, 0.0625
    %v390 = vmul.f32 %v354, 0.0625
    %v391 = vmul.f32 %v357, 0.0625
    %v392 = vmul.f32 %v360, 0.0625
    %v393 = vmul.f32 %v361, %v361
    %v394 = vmul.f32 %v362, %v362
    %v395 = vmul.f32 %v363, %v363
    %v396 = vmul.f32 %v364, %v364
    %v397 = vmul.f32 %v365, %v365
    %v398 = vmul.f32 %v366, %v366
    %v399 = vmul.f32 %v367, %v367
    %v400 = vmul.f32 %v368, %v368
    %v401 = vmul.f32 %v369, %v369
    %v402 = vmul.f32 %v370, %v370
    %v403 = vmul.f32 %v371, %v371
    %v404 = vmul.f32 %v372, %v372
    %v405 = vmul.f32 %v373, %v373
    %v406 = vmul.f32 %v374, %v374
    %v407 = vmul.f32 %v375, %v375
    %v408 = vmul.f32 %v376, %v376
    %v409 = vsub.f32 %v377, %v393
    %v410 = vsub.f32 %v378, %v394
    %v411 = vsub.f32 %v379, %v395
    %v412 = vsub.f32 %v380, %v396
    %v413 = vsub.f32 %v381, %v397
    %v414 = vsub.f32 %v382, %v398
    %v415 = vsub.f32 %v383, %v399
    %v416 = vsub.f32 %v384, %v400
    %v417 = vsub.f32 %v385, %v401
    %v418 = vsub.f32 %v386, %v402
    %v419 = vsub.f32 %v387, %v403
    %v420 = vsub.f32 %v388, %v404
    %v421 = vsub.f32 %v389, %v405
    %v422 = vsub.f32 %v390, %v406
    %v423 = vsub.f32 %v391, %v407
    %v424 = vsub.f32 %v392, %v408
    %v425 = vmax.f32 %v409, 0.0
    %v426 = vmax.f32 %v410, 0.0
    %v427 = vmax.f32 %v411, 0.0
    %v428 = vmax.f32 %v412, 0.0
    %v429 = vmax.f32 %v413, 0.0
    %v430 = vmax.f32 %v414, 0.0
    %v431 = vmax.f32 %v415, 0.0
    %v432 = vmax.f32 %v416, 0.0
    %v433 = vmax.f32 %v417, 0.0
    %v434 = vmax.f32 %v418, 0.0
    %v435 = vmax.f32 %v419, 0.0
    %v436 = vmax.f32 %v420, 0.0
    %v437 = vmax.f32 %v421, 0.0
    %v438 = vmax.f32 %v422, 0.0
    %v439 = vmax.f32 %v423, 0.0
    %v440 = vmax.f32 %v424, 0.0
    %v441 = vadd.f32 %v425, 1e-05
    %v442 = vadd.f32 %v426, 1e-05
    %v443 = vadd.f32 %v427, 1e-05
    %v444 = vadd.f32 %v428, 1e-05
    %v445 = vadd.f32 %v429, 1e-05
    %v446 = vadd.f32 %v430, 1e-05
    %v447 = vadd.f32 %v431, 1e-05
    %v448 = vadd.f32 %v432, 1e-05
    %v449 = vadd.f32 %v433, 1e-05
    %v450 = vadd.f32 %v434, 1e-05
    %v451 = vadd.f32 %v435, 1e-05
    %v452 = vadd.f32 %v436, 1e-05
    %v453 = vadd.f32 %v437, 1e-05
    %v454 = vadd.f32 %v438, 1e-05
    %v455 = vadd.f32 %v439, 1e-05
    %v456 = vadd.f32 %v440, 1e-05
    %v457 = vrsqrt.pop %v441
    %v458 = vrsqrt.pop %v442
    %v459 = vrsqrt.pop %v443
    %v460 = vrsqrt.pop %v444
    %v461 = vrsqrt.pop %v445
    %v462 = vrsqrt.pop %v446
    %v463 = vrsqrt.pop %v447
    %v464 = vrsqrt.pop %v448
    %v465 = vrsqrt.pop %v449
    %v466 = vrsqrt.pop %v450
    %v467 = vrsqrt.pop %v451
    %v468 = vrsqrt.pop %v452
    %v469 = vrsqrt.pop %v453
    %v470 = vrsqrt.pop %v454
    %v471 = vrsqrt.pop %v455
    %v472 = vrsqrt.pop %v456
    %v473 = vsub.f32 %v170, %v361
    %v474 = vsub.f32 %v175, %v362
    %v475 = vsub.f32 %v180, %v363
    %v476 = vsub.f32 %v185, %v364
    %v477 = vsub.f32 %v190, %v365
    %v478 = vsub.f32 %v195, %v366
    %v479 = vsub.f32 %v200, %v367
    %v480 = vsub.f32 %v205, %v368
    %v481 = vsub.f32 %v210, %v369
    %v482 = vsub.f32 %v215, %v370
    %v483 = vsub.f32 %v220, %v371
    %v484 = vsub.f32 %v225, %v372
    %v485 = vsub.f32 %v230, %v373
    %v486 = vsub.f32 %v235, %v374
    %v487 = vsub.f32 %v240, %v375
    %v488 = vsub.f32 %v245, %v376
    %v489 = vld [vmem:[%s3] sm:$0x1]
    %v491 = vlaneseq
    %v492 = vshrl.u32 %v491, 7
    %v493 = vsub.s32 0, %v492
    %v494 = vrot.slane %v489, %v493
    %v496 = vmul.f32 %v457, %v494
    %v497 = vmul.f32 %v458, %v494
    %v498 = vmul.f32 %v459, %v494
    %v499 = vmul.f32 %v460, %v494
    %v500 = vmul.f32 %v461, %v494
    %v501 = vmul.f32 %v462, %v494
    %v502 = vmul.f32 %v463, %v494
    %v503 = vmul.f32 %v464, %v494
    %v504 = vmul.f32 %v465, %v494
    %v505 = vmul.f32 %v466, %v494
    %v506 = vmul.f32 %v467, %v494
    %v507 = vmul.f32 %v468, %v494
    %v508 = vmul.f32 %v469, %v494
    %v509 = vmul.f32 %v470, %v494
    %v510 = vmul.f32 %v471, %v494
    %v511 = vmul.f32 %v472, %v494
    %v512 = vmul.f32 %v473, %v496
    %v513 = vmul.f32 %v474, %v497
    %v514 = vmul.f32 %v475, %v498
    %v515 = vmul.f32 %v476, %v499
    %v516 = vmul.f32 %v477, %v500
    %v517 = vmul.f32 %v478, %v501
    %v518 = vmul.f32 %v479, %v502
    %v519 = vmul.f32 %v480, %v503
    %v520 = vmul.f32 %v481, %v504
    %v521 = vmul.f32 %v482, %v505
    %v522 = vmul.f32 %v483, %v506
    %v523 = vmul.f32 %v484, %v507
    %v524 = vmul.f32 %v485, %v508
    %v525 = vmul.f32 %v486, %v509
    %v526 = vmul.f32 %v487, %v510
    %v527 = vmul.f32 %v488, %v511
    %v528 = vld [vmem:[%s4] sm:$0x1]
    %v530 = vlaneseq
    %v531 = vshrl.u32 %v530, 7
    %v532 = vsub.s32 0, %v531
    %v533 = vrot.slane %v528, %v532
    %v535 = vadd.f32 %v512, %v533
    %v536 = vadd.f32 %v513, %v533
    %v537 = vadd.f32 %v514, %v533
    %v538 = vadd.f32 %v515, %v533
    %v539 = vadd.f32 %v516, %v533
    %v540 = vadd.f32 %v517, %v533
    %v541 = vadd.f32 %v518, %v533
    %v542 = vadd.f32 %v519, %v533
    %v543 = vadd.f32 %v520, %v533
    %v544 = vadd.f32 %v521, %v533
    %v545 = vadd.f32 %v522, %v533
    %v546 = vadd.f32 %v523, %v533
    %v547 = vadd.f32 %v524, %v533
    %v548 = vadd.f32 %v525, %v533
    %v549 = vadd.f32 %v526, %v533
    %v550 = vadd.f32 %v527, %v533
    %v551 = vmax.f32 %v535, 0.0
    %v552 = vmax.f32 %v536, 0.0
    %v553 = vmax.f32 %v537, 0.0
    %v554 = vmax.f32 %v538, 0.0
    %v555 = vmax.f32 %v539, 0.0
    %v556 = vmax.f32 %v540, 0.0
    %v557 = vmax.f32 %v541, 0.0
    %v558 = vmax.f32 %v542, 0.0
    %v559 = vmax.f32 %v543, 0.0
    %v560 = vmax.f32 %v544, 0.0
    %v561 = vmax.f32 %v545, 0.0
    %v562 = vmax.f32 %v546, 0.0
    %v563 = vmax.f32 %v547, 0.0
    %v564 = vmax.f32 %v548, 0.0
    %v565 = vmax.f32 %v549, 0.0
    %v566 = vmax.f32 %v550, 0.0
    %v567 = vld [vmem:[%s5] sm:$0x3]
    %v568 = vld [vmem:[%s6] sm:$0x3]
    %570 = vset.pattern.permute.xlu0 0
    %571 = vperm.xlu0 %570, %v568
    %v572 = vpop.permute.xlu0 %571
    %v575 = vsel %vm248, %v567, 0
    %v578 = vsel %vm248, %v551, 0
    %v581 = vsel %vm248, %v552, 0
    %v584 = vsel %vm248, %v553, 0
    %v587 = vsel %vm248, %v554, 0
    %v590 = vsel %vm248, %v555, 0
    %v593 = vsel %vm248, %v556, 0
    %v596 = vsel %vm248, %v557, 0
    %v599 = vsel %vm248, %v558, 0
    %v602 = vsel %vm248, %v559, 0
    %v605 = vsel %vm248, %v560, 0
    %v608 = vsel %vm248, %v561, 0
    %v611 = vsel %vm248, %v562, 0
    %v614 = vsel %vm248, %v563, 0
    %v617 = vsel %vm248, %v564, 0
    %v620 = vsel %vm248, %v565, 0
    %v623 = vsel %vm248, %v566, 0
    %625 = vmatprep.subr.mxu0 0.0
    %626 = vmatpush1.xpose.msra.mxu0 %v578
    %627 = vmatprep.subr.mxu0 0.0
    %628 = vmatpush1.xpose.msra.mxu0 %v581
    %629 = vmatprep.subr.mxu0 0.0
    %630 = vmatpush1.xpose.msra.mxu0 %v584
    %631 = vmatprep.subr.mxu0 0.0
    %632 = vmatpush1.xpose.msra.mxu0 %v587
    %633 = vmatprep.subr.mxu0 0.0
    %634 = vmatpush1.xpose.msra.mxu0 %v590
    %635 = vmatprep.subr.mxu0 0.0
    %636 = vmatpush1.xpose.msra.mxu0 %v593
    %637 = vmatprep.subr.mxu0 0.0
    %638 = vmatpush1.xpose.msra.mxu0 %v596
    %639 = vmatprep.subr.mxu0 0.0
    %640 = vmatpush1.xpose.msra.mxu0 %v599
    %641 = vmatprep.subr.mxu0 0.0
    %642 = vmatpush1.xpose.msra.mxu0 %v602
    %643 = vmatprep.subr.mxu0 0.0
    %644 = vmatpush1.xpose.msra.mxu0 %v605
    %645 = vmatprep.subr.mxu0 0.0
    %646 = vmatpush1.xpose.msra.mxu0 %v608
    %647 = vmatprep.subr.mxu0 0.0
    %648 = vmatpush1.xpose.msra.mxu0 %v611
    %649 = vmatprep.subr.mxu0 0.0
    %650 = vmatpush1.xpose.msra.mxu0 %v614
    %651 = vmatprep.subr.mxu0 0.0
    %652 = vmatpush1.xpose.msra.mxu0 %v617
    %653 = vmatprep.subr.mxu0 0.0
    %654 = vmatpush1.xpose.msra.mxu0 %v620
    %655 = vmatprep.subr.mxu0 0.0
    %656 = vmatpush1.xpose.msra.mxu0 %v623
    %657 = vmatprep.subr.mxu0 0.0
    %658 = vmatpush1.xpose.msra.mxu0 0.0
    %659 = vmatprep.subr.mxu0 0.0
    %660 = vmatpush1.xpose.msra.mxu0 0.0
    %661 = vmatprep.subr.mxu0 0.0
    %662 = vmatpush1.xpose.msra.mxu0 0.0
    %663 = vmatprep.subr.mxu0 0.0
    %664 = vmatpush1.xpose.msra.mxu0 0.0
    %665 = vmatprep.subr.mxu0 0.0
    %666 = vmatpush1.xpose.msra.mxu0 0.0
    %667 = vmatprep.subr.mxu0 0.0
    %668 = vmatpush1.xpose.msra.mxu0 0.0
    %669 = vmatprep.subr.mxu0 0.0
    %670 = vmatpush1.xpose.msra.mxu0 0.0
    %671 = vmatprep.subr.mxu0 0.0
    %672 = vmatpush1.xpose.msra.mxu0 0.0
    %673 = vmatprep.subr.mxu0 0.0
    %674 = vmatpush1.xpose.msra.mxu0 0.0
    %675 = vmatprep.subr.mxu0 0.0
    %676 = vmatpush1.xpose.msra.mxu0 0.0
    %677 = vmatprep.subr.mxu0 0.0
    %678 = vmatpush1.xpose.msra.mxu0 0.0
    %679 = vmatprep.subr.mxu0 0.0
    %680 = vmatpush1.xpose.msra.mxu0 0.0
    %681 = vmatprep.subr.mxu0 0.0
    %682 = vmatpush1.xpose.msra.mxu0 0.0
    %683 = vmatprep.subr.mxu0 0.0
    %684 = vmatpush1.xpose.msra.mxu0 0.0
    %685 = vmatprep.subr.mxu0 0.0
    %686 = vmatpush1.xpose.msra.mxu0 0.0
    %687 = vmatprep.subr.mxu0 0.0
    %688 = vmatpush1.xpose.msra.mxu0 0.0
    %689 = vmatprep.mubr.f32.mxu0 0.0
    %690 = vmatmul.mubr.f32.gmra.mrb[0].mxu0 %v575
    %v691 = vpop.f32.mrb[0].mxu0
    %v692 = vadd.f32 %v572, %v691
    %v693 = vpop.f32.mrb[0].mxu0
    %694 = vdwg.mxu0
    %v695 = vxor.u32 %v692, 2147483648
    %v696 = vmul.f32 %v695, 1.442695
    %v697 = vpow.pop %v696
    %v698 = vadd.f32 %v697, 1.0
    %v699 = vrcp.pop %v698
    %v700 = vmul.f32 1.0, %v699
    %701 = vst [vmem:[#allocation2] sm:$0x3] %v700
    // Predicated region
    $region30: #{tpu_custom_call.1} parent=1 // pred_check
      _
    $region31: #{tpu_custom_call.1} parent=1 // pred_check_branch
      %703 = sbr.rel (0) target = $region33
    $region32: #{tpu_custom_call.1} parent=1 // pred_region
      %s705 = ssub.s32 32, 32
      %706 = vsyncadd [#allocation3], %s705
      %s708 = sshll.u32 [#allocation2], 4
      %s709 = int_to_ptr.vmem [resolvable:$true] %s708
      %711 = dma.vmem_to_hbm [thread:$0]  %s709, 32, %s7, [#allocation3]
    $region33: #{tpu_custom_call.1} parent=1 // pred_fallthru
      _
    // Predicated region
    $region34: #{tpu_custom_call.1} parent=1 // pred_check
      _
    $region35: #{tpu_custom_call.1} parent=1 // pred_check_branch
      %713 = sbr.rel (0) target = $region37
    $region36: #{tpu_custom_call.1} parent=1 // pred_region
      %714 = dma.done [#allocation3], 32
    $region37: #{tpu_custom_call.1} parent=1 // pred_fallthru
      _
    %715 = vsyncpa [#allocation3], 1

</llo_original>
